<compile_context>
chip_gen: v6e
topology: v6e:2x2x1
jax: 0.10.0
libtpu: 0.0.40
codegen_flags: <defaults>
</compile_context>

<pallas_src>
import jax
import jax.numpy as jnp
from jax.experimental import pallas as pl
from jax.experimental.pallas import tpu as pltpu

LANES = 128
DEFAULT_BLOCK_ROWS = 4096  # 4096*128*4B = 2 MiB per f32 input tile


def _sublane_pack(dtype) -> int:
    """Sublane tiling requirement for the second-minor dim, per dtype width."""
    itemsize = jnp.dtype(dtype).itemsize
    if itemsize >= 4:
        return 8
    if itemsize == 2:
        return 16
    return 32


def _dice_partial_kernel(x_ref, t_ref, out_ref):
    """One full tile: (block_rows, 128) logits/targets -> per-lane partial sums.

    out_ref block is (1, 8, 128); row 0 = intersection partial, row 1 = union partial.
    Rows 2..7 are never read by the wrapper (no zero-fill needed).
    """
    x = x_ref[...].astype(jnp.float32)
    t = t_ref[...].astype(jnp.float32)

    # sigmoid(x) == 0.5 * tanh(0.5 * x) + 0.5  -> single EUP transcendental.
    sig = 0.5 * jnp.tanh(0.5 * x) + 0.5

    # Sublane-only (VPU) reductions; the cheap 128-lane reduce happens in the wrapper.
    inter = jnp.sum(sig * t, axis=0, keepdims=True)                       # (1, 128)
    union = jnp.sum(sig, axis=0, keepdims=True) + jnp.sum(t, axis=0, keepdims=True)

    out_ref[0:1, 0:1, :] = inter.reshape(1, 1, LANES)
    out_ref[0:1, 1:2, :] = union.reshape(1, 1, LANES)


def dice_loss_t(inputs, targets, epsilon=1e-4, block_rows=None):
    """Pallas-TPU equivalent of DiceLoss_T.forward(inputs, targets)."""
    total = int(inputs.size)
    x = inputs.reshape(-1)
    t = targets.reshape(-1)
    # Keep native dtype for the HBM stream; only bool gets normalized.
    if x.dtype == jnp.bool_:
        x = x.astype(jnp.float32)
    if t.dtype == jnp.bool_:
        t = t.astype(jnp.float32)

    x_item = jnp.dtype(x.dtype).itemsize
    t_item = jnp.dtype(t.dtype).itemsize
    pack = max(_sublane_pack(x.dtype), _sublane_pack(t.dtype))
    rows_floor = total // LANES

    # --- Tile selection: full tiles only (no masking, no full-array pad). ---
    if block_rows is not None:
        block_rows = max(pack, (int(block_rows) // pack) * pack)
        block_rows = min(block_rows, max(pack, (rows_floor // pack) * pack))
    elif rows_floor >= 2 * pack:
        # Aim for >= 2 tiles so the "parallel" axis feeds both TCs (v7x megacore),
        # capped at DEFAULT_BLOCK_ROWS to amortize per-step overhead on big inputs.
        block_rows = min(DEFAULT_BLOCK_ROWS, (rows_floor // (2 * pack)) * pack)
    elif rows_floor >= pack:
        block_rows = pack
    else:
        block_rows = 0

    n_tiles = rows_floor // block_rows if block_rows > 0 else 0

    intersection = jnp.float32(0.0)
    union = jnp.float32(0.0)
    main = 0

    if n_tiles > 0:
        main_rows = n_tiles * block_rows
        main = main_rows * LANES
        x2 = x[:main].reshape(main_rows, LANES)
        t2 = t[:main].reshape(main_rows, LANES)

        in_tile_bytes = block_rows * LANES * (x_item + t_item)     # one step, both inputs
        f32_tile_bytes = block_rows * LANES * 4
        vmem_limit = 2 * in_tile_bytes + 8 * f32_tile_bytes + (4 << 20)
        vmem_limit = int(min(max(vmem_limit, 4 << 20), 56 << 20))  # safe on v7x 64 MiB/TC

        partials = pl.pallas_call(
            _dice_partial_kernel,
            out_shape=jax.ShapeDtypeStruct((n_tiles, 8, LANES), jnp.float32),
            grid=(n_tiles,),
            in_specs=[
                pl.BlockSpec((block_rows, LANES), lambda i: (i, 0)),
                pl.BlockSpec((block_rows, LANES), lambda i: (i, 0)),
            ],
            out_specs=pl.BlockSpec((1, 8, LANES), lambda i: (i, 0, 0)),
            compiler_params=pltpu.CompilerParams(
                dimension_semantics=("parallel",),
                vmem_limit_bytes=vmem_limit,
            ),
            cost_estimate=pl.CostEstimate(
                flops=6 * main,
                transcendentals=main,
                bytes_accessed=main * (x_item + t_item) + n_tiles * 8 * LANES * 4,
            ),
        )(x2, t2)

        # Single fused pass over the partial slab; rows 0/1 only.
        s = jnp.sum(partials[:, :2, :], axis=(0, 2))
        intersection = s[0]
        union = s[1]

    if main < total:
        # Ragged tail (< one block worth of elements): plain fused XLA pass,
        # no full-array pad/copy, no in-kernel masking.
        xt = x[main:].astype(jnp.float32)
        tt = t[main:].astype(jnp.float32)
        st = jax.nn.sigmoid(xt)
        intersection = intersection + jnp.sum(st * tt)
        union = union + jnp.sum(st) + jnp.sum(tt)

    dice = (2.0 * intersection + epsilon) / (union + epsilon)
    return 1.0 - dice


def _reference_dice(inputs, targets, epsilon=1e-4):
    """Pure-JAX reference with the same math as the PyTorch module."""
    sig = jax.nn.sigmoid(inputs.astype(jnp.float32)).reshape(-1)
    t = targets.astype(jnp.float32).reshape(-1)
    inter = jnp.sum(sig * t)
    union = jnp.sum(sig) + jnp.sum(t)
    return 1.0 - (2.0 * inter + epsilon) / (union + epsilon)


if __name__ == "__main__":
    key = jax.random.PRNGKey(0)
    k1, k2, k3, k4, k5, k6 = jax.random.split(key, 6)

    # Case 1: lane-aligned f32 (2*4*16*16 = 2048 = 16*128) -> 2 full tiles, no tail.
    x1 = jax.random.normal(k1, (2, 4, 16, 16), dtype=jnp.float32)            # logits
    t1 = (jax.random.uniform(k2, (2, 4, 16, 16)) > 0.5).astype(jnp.float32)  # binary mask
    out1 = jax.block_until_ready(dice_loss_t(x1, t1))
    ref1 = jax.block_until_ready(_reference_dice(x1, t1))
    assert jnp.allclose(out1, ref1, rtol=1e-5, atol=1e-5), (out1, ref1)

    # Case 2: ragged total (2*3*13*17 = 1326) -> one full tile + wrapper tail.
    x2 = jax.random.normal(k3, (2, 3, 13, 17), dtype=jnp.float32)
    t2 = (jax.random.uniform(k4, (2, 3, 13, 17)) > 0.5).astype(jnp.float32)
    out2 = jax.block_until_ready(dice_loss_t(x2, t2))
    ref2 = jax.block_until_ready(_reference_dice(x2, t2))
    assert jnp.allclose(out2, ref2, rtol=1e-5, atol=1e-5), (out2, ref2)

    # Case 3: native bf16 streaming (no wrapper upcast copy), 2 tiles of 64 rows.
    x3 = jax.random.normal(k5, (4, 4, 32, 32), dtype=jnp.bfloat16)
    t3 = (jax.random.uniform(k6, (4, 4, 32, 32)) > 0.5).astype(jnp.bfloat16)
    out3 = jax.block_until_ready(dice_loss_t(x3, t3))
    ref3 = jax.block_until_ready(_reference_dice(x3, t3))
    assert jnp.allclose(out3, ref3, rtol=1e-3, atol=1e-3), (out3, ref3)

    print("KERNEL_OK")
</pallas_src>

<mosaic_0001>
module attributes {stable_mosaic.version = 11 : i64} {
  func.func @_dice_partial_kernel(%arg0: i32, %arg1: memref<8x128xf32, #tpu.memory_space<vmem>>, %arg2: memref<8x128xf32, #tpu.memory_space<vmem>>, %arg3: memref<1x8x128xf32, #tpu.memory_space<vmem>>) attributes {dimension_semantics = [#tpu.dimension_semantics<parallel>], iteration_bounds = array<i64: 2>, scalar_prefetch = 0 : i64, scratch_operands = 0 : i64, tpu.core_type = #tpu.core_type<tc>, window_params = [{transform_indices = @transform_0, window_bounds = array<i64: 8, 128>}, {transform_indices = @transform_1, window_bounds = array<i64: 8, 128>}, {transform_indices = @transform_2, window_bounds = array<i64: 1, 8, 128>}]} {
    %c0 = arith.constant 0 : index
    %c0_0 = arith.constant 0 : index
    %0 = vector.load %arg1[%c0, %c0_0] : memref<8x128xf32, #tpu.memory_space<vmem>>, vector<8x128xf32>
    %c0_1 = arith.constant 0 : index
    %c0_2 = arith.constant 0 : index
    %1 = vector.load %arg2[%c0_1, %c0_2] : memref<8x128xf32, #tpu.memory_space<vmem>>, vector<8x128xf32>
    %cst = arith.constant 5.000000e-01 : f32
    %2 = vector.broadcast %cst : f32 to vector<8x128xf32>
    %3 = arith.mulf %2, %0 : vector<8x128xf32>
    %4 = math.tanh %3 : vector<8x128xf32>
    %cst_3 = arith.constant 5.000000e-01 : f32
    %5 = vector.broadcast %cst_3 : f32 to vector<8x128xf32>
    %6 = arith.mulf %5, %4 : vector<8x128xf32>
    %cst_4 = arith.constant 5.000000e-01 : f32
    %7 = vector.broadcast %cst_4 : f32 to vector<8x128xf32>
    %8 = arith.addf %6, %7 : vector<8x128xf32>
    %9 = arith.mulf %8, %1 : vector<8x128xf32>
    %cst_5 = arith.constant dense<0.000000e+00> : vector<128xf32>
    %10 = vector.multi_reduction <add>, %9, %cst_5 [0] : vector<8x128xf32> to vector<128xf32>
    %11 = vector.shape_cast %10 : vector<128xf32> to vector<1x128xf32>
    %cst_6 = arith.constant dense<0.000000e+00> : vector<128xf32>
    %12 = vector.multi_reduction <add>, %8, %cst_6 [0] : vector<8x128xf32> to vector<128xf32>
    %13 = vector.shape_cast %12 : vector<128xf32> to vector<1x128xf32>
    %cst_7 = arith.constant dense<0.000000e+00> : vector<128xf32>
    %14 = vector.multi_reduction <add>, %1, %cst_7 [0] : vector<8x128xf32> to vector<128xf32>
    %15 = vector.shape_cast %14 : vector<128xf32> to vector<1x128xf32>
    %16 = arith.addf %13, %15 : vector<1x128xf32>
    %17 = vector.shape_cast %11 : vector<1x128xf32> to vector<1x1x128xf32>
    %c0_8 = arith.constant 0 : index
    %c0_9 = arith.constant 0 : index
    %c0_10 = arith.constant 0 : index
    %18 = vector.load %arg3[%c0_8, %c0_9, %c0_10] : memref<1x8x128xf32, #tpu.memory_space<vmem>>, vector<1x1x128xf32>
    tpu.vector_store %arg3[%c0_8, %c0_9, %c0_10], %17 {strides = array<i32>} : memref<1x8x128xf32, #tpu.memory_space<vmem>>, vector<1x1x128xf32>,
    %19 = vector.shape_cast %16 : vector<1x128xf32> to vector<1x1x128xf32>
    %c0_11 = arith.constant 0 : index
    %c1 = arith.constant 1 : index
    %c0_12 = arith.constant 0 : index
    %20 = vector.load %arg3[%c0_11, %c1, %c0_12] : memref<1x8x128xf32, #tpu.memory_space<vmem>>, vector<1x1x128xf32>
    tpu.vector_store %arg3[%c0_11, %c1, %c0_12], %19 {strides = array<i32>} : memref<1x8x128xf32, #tpu.memory_space<vmem>>, vector<1x1x128xf32>,
    return
  }
  func.func @transform_0(%arg0: i32) -> (i32, i32) {
    %c0_i32 = arith.constant 0 : i32
    %c0_i32_0 = arith.constant 0 : i32
    return %arg0, %c0_i32 : i32, i32
  }
  func.func @transform_1(%arg0: i32) -> (i32, i32) {
    %c0_i32 = arith.constant 0 : i32
    %c0_i32_0 = arith.constant 0 : i32
    return %arg0, %c0_i32 : i32, i32
  }
  func.func @transform_2(%arg0: i32) -> (i32, i32, i32) {
    %c0_i32 = arith.constant 0 : i32
    %c0_i32_0 = arith.constant 0 : i32
    %c0_i32_1 = arith.constant 0 : i32
    return %arg0, %c0_i32, %c0_i32_0 : i32, i32, i32
  }
}

</mosaic_0001>

<llo_original>
// kernel: tpu_custom_call.1
$region0: #{tpu_custom_call.1}
  #allocation0 [shape = 'u32[]', space=smem, size = 0x4, offset = 0x4, fixed_abs, tag = 'smem constant byte address 0x4 - core index']
  #allocation1 [shape = 'u32[144,128]{1,0:T(1,128)}', space=vmem, size = 0x12000, scoped, tag = 'internal scratch']
  %s0 = inlined_call_operand.hbm [shape: f32[16,128], index: 0, kind: input, shape index: {}]
  %s1 = inlined_call_operand.hbm [shape: f32[16,128], index: 1, kind: input, shape index: {}]
  %s2 = inlined_call_operand.hbm [shape: f32[2,8,128], index: 2, kind: output, shape index: {}]
  %s3 = sld [smem:[#allocation0]]
  $region49: #{tpu_custom_call.1} parent=0
    _
  %s5 = ssub.s32 1, %s3
  %s6 = scalar_select 0, %s5, %s3
  $region1: #{tpu_custom_call.1} parent=0
    #allocation2 [shape = 'u8[8192]{0}', space=vmem, size = 0x2000, scoped, tag = 'input window, operand 0']
    #allocation3 [shape = 's32[2]{0}', space=sflag, size = 0x8, scoped, tag = 'scoped memory for tpu_custom_call.1']
    #allocation4 [shape = 's32[2]{0}', space=sflag, size = 0x8, scoped, tag = 'scoped memory for tpu_custom_call.1']
    #allocation5 [shape = 'u8[8192]{0}', space=vmem, size = 0x2000, scoped, tag = 'input window, operand 1']
    #allocation6 [shape = 's32[2]{0}', space=sflag, size = 0x8, scoped, tag = 'scoped memory for tpu_custom_call.1']
    #allocation7 [shape = 'u8[8192]{0}', space=vmem, size = 0x2000, scoped, tag = 'output window, operand 0']
    %7 = vsyncpa [#allocation3], 0
    %s8 = scalar_lea.sflag [#allocation3], 1
    %9 = vsyncpa %s8, 0
    %10 = vsyncpa [#allocation6], 0
    %s11 = scalar_lea.sflag [#allocation6], 1
    %12 = vsyncpa %s11, 0
    %13 = vsyncpa [#allocation4], 0
    %s14 = scalar_lea.sflag [#allocation4], 1
    %15 = vsyncpa %s14, 0
    loop: start=0, step=1, limit=4
    $region2: #{tpu_custom_call.1} parent=1 // loop_pre_header
      _
    $region3: #{tpu_custom_call.1} parent=1 // loop_header
      %s17 = sphi 0, %s21
      %p18 = scmp.ge.s32.totalorder %s17, 4
      %s27 = sphi 0, %s29
      %s30 = sphi 0, %s27
      %s31 = sphi 0, %s30
      %s47 = sphi 0, %s31
      %s53 = sphi 0, %s55
      %s56 = sphi 0, %s53
      %s57 = sphi 0, %s56
      %s73 = sphi 0, %s57
      %s79 = sphi 0, %s81
      %s82 = sphi 0, %s79
      %s83 = sphi 0, %s82
      %s99 = sphi 0, %s83
    $region4: #{tpu_custom_call.1} parent=1 // loop_header_branch
      %20 = sbr.rel (%p18) target = $region8
    $region5: #{tpu_custom_call.1} parent=1 // loop_body
      %s22 = ssub.s32 %s17, 1
      %s23 = ssub.s32 %s17, 2
      %s24 = sadd.s32 %s17, 1
      %s25 = ssub.s32 %s17, %s24
      %p26 = scmp.eq.s32.totalorder %s25, 0
      %s28 = sadd.s32 %s27, 1
      %s29 = scalar_select %p26, %s27, %s28
      %p32 = pneg %p26
      %p33 = scmp.eq.s32.totalorder %s17, 1
      %p34 = por %p32, %p33
      %p35 = scmp.ne.s32.totalorder %s27, %s30
      %p36 = scmp.eq.s32.totalorder %s17, 0
      %p37 = por %p35, %p36
      %p38 = scmp.ne.s32.totalorder %s27, %s30
      %p39 = scmp.eq.s32.totalorder %s22, 1
      %p40 = por %p38, %p39
      %p41 = scmp.ne.s32.totalorder %s30, %s31
      %p42 = scmp.eq.s32.totalorder %s22, 0
      %p43 = por %p41, %p42
      %p44 = scmp.ne.s32.totalorder %s30, %s31
      %p45 = scmp.eq.s32.totalorder %s23, 1
      %p46 = por %p44, %p45
      %p48 = scmp.ne.s32.totalorder %s31, %s47
      %p49 = scmp.eq.s32.totalorder %s23, 0
      %p50 = por %p48, %p49
      %s51 = ssub.s32 %s17, %s24
      %p52 = scmp.eq.s32.totalorder %s51, 0
      %s54 = sadd.s32 %s53, 1
      %s55 = scalar_select %p52, %s53, %s54
      %p58 = pneg %p52
      %p59 = scmp.eq.s32.totalorder %s17, 1
      %p60 = por %p58, %p59
      %p61 = scmp.ne.s32.totalorder %s53, %s56
      %p62 = scmp.eq.s32.totalorder %s17, 0
      %p63 = por %p61, %p62
      %p64 = scmp.ne.s32.totalorder %s53, %s56
      %p65 = scmp.eq.s32.totalorder %s22, 1
      %p66 = por %p64, %p65
      %p67 = scmp.ne.s32.totalorder %s56, %s57
      %p68 = scmp.eq.s32.totalorder %s22, 0
      %p69 = por %p67, %p68
      %p70 = scmp.ne.s32.totalorder %s56, %s57
      %p71 = scmp.eq.s32.totalorder %s23, 1
      %p72 = por %p70, %p71
      %p74 = scmp.ne.s32.totalorder %s57, %s73
      %p75 = scmp.eq.s32.totalorder %s23, 0
      %p76 = por %p74, %p75
      %s77 = ssub.s32 %s17, %s24
      %p78 = scmp.eq.s32.totalorder %s77, 0
      %s80 = sadd.s32 %s79, 1
      %s81 = scalar_select %p78, %s79, %s80
      %p84 = pneg %p78
      %p85 = scmp.eq.s32.totalorder %s17, 1
      %p86 = por %p84, %p85
      %p87 = scmp.ne.s32.totalorder %s79, %s82
      %p88 = scmp.eq.s32.totalorder %s17, 0
      %p89 = por %p87, %p88
      %p90 = scmp.ne.s32.totalorder %s79, %s82
      %p91 = scmp.eq.s32.totalorder %s22, 1
      %p92 = por %p90, %p91
      %p93 = scmp.ne.s32.totalorder %s82, %s83
      %p94 = scmp.eq.s32.totalorder %s22, 0
      %p95 = por %p93, %p94
      %p96 = scmp.ne.s32.totalorder %s82, %s83
      %p97 = scmp.eq.s32.totalorder %s23, 1
      %p98 = por %p96, %p97
      %p100 = scmp.ne.s32.totalorder %s83, %s99
      %p101 = scmp.eq.s32.totalorder %s23, 0
      %p102 = por %p100, %p101
      %p103 = scmp.le.s32.totalorder 1, %s17
      %p104 = scmp.lt.s32.totalorder %s17, 3
      %p105 = pnand %p103, %p104
      %p106 = pneg %p105
      // Predicated region
      $region9: #{tpu_custom_call.1} parent=5 // pred_check
        _
      $region10: #{tpu_custom_call.1} parent=5 // pred_check_branch
        %108 = sbr.rel (%p105) target = $region12
      $region11: #{tpu_custom_call.1} parent=5 // pred_region
        %s109 = ssub.s32 %s17, 1
      $region12: #{tpu_custom_call.1} parent=5 // pred_fallthru
        _
      %p110 = scmp.lt.s32.totalorder %s17, 2
      // Predicated region
      $region13: #{tpu_custom_call.1} parent=5 // pred_check
        %p111 = pneg %p110
      $region14: #{tpu_custom_call.1} parent=5 // pred_check_branch
        %113 = sbr.rel (%p111) target = $region16
      $region15: #{tpu_custom_call.1} parent=5 // pred_region
        // Predicated region
        $region17: #{tpu_custom_call.1} parent=15 // pred_check
          %p114 = pneg %p37
        $region18: #{tpu_custom_call.1} parent=15 // pred_check_branch
          %116 = sbr.rel (%p114) target = $region20
        $region19: #{tpu_custom_call.1} parent=15 // pred_region
          %s117 = sand.u32 %s27, 1
          %s118 = scalar_lea.sflag [#allocation3], %s117
          %s119 = sand.u32 %s27, 1
          %s120 = smul.addr %s119, 8
          %s121 = scalar_lea.vmem [#allocation2], %s120
          %s123 = ssub.s32 128, 128
          %124 = vsyncadd %s118, %s123
          %s125 = smul.addr %s17, 128
          %s126 = scalar_lea.hbm %s0, %s125
          %s128 = sshll.u32 %s121, 4
          %s129 = int_to_ptr.vmem [resolvable:$true] %s128
          %131 = dma.hbm_to_vmem [thread:$0]  %s126, 128, %s129, %s118
        $region20: #{tpu_custom_call.1} parent=15 // pred_fallthru
          _
        // Predicated region
        $region21: #{tpu_custom_call.1} parent=15 // pred_check
          %p132 = pneg %p63
        $region22: #{tpu_custom_call.1} parent=15 // pred_check_branch
          %134 = sbr.rel (%p132) target = $region24
        $region23: #{tpu_custom_call.1} parent=15 // pred_region
          %s135 = sand.u32 %s53, 1
          %s136 = scalar_lea.sflag [#allocation6], %s135
          %s137 = sand.u32 %s53, 1
          %s138 = smul.addr %s137, 8
          %s139 = scalar_lea.vmem [#allocation5], %s138
          %s141 = ssub.s32 128, 128
          %142 = vsyncadd %s136, %s141
          %s143 = smul.addr %s17, 128
          %s144 = scalar_lea.hbm %s1, %s143
          %s146 = sshll.u32 %s139, 4
          %s147 = int_to_ptr.vmem [resolvable:$true] %s146
          %149 = dma.hbm_to_vmem [thread:$0]  %s144, 128, %s147, %s136
        $region24: #{tpu_custom_call.1} parent=15 // pred_fallthru
          _
      $region16: #{tpu_custom_call.1} parent=5 // pred_fallthru
        _
      %p150 = scmp.le.s32.totalorder 1, %s17
      %p151 = scmp.lt.s32.totalorder %s17, 3
      %p152 = pnand %p150, %p151
      %p153 = pneg %p152
      // Predicated region
      $region25: #{tpu_custom_call.1} parent=5 // pred_check
        _
      $region26: #{tpu_custom_call.1} parent=5 // pred_check_branch
        %155 = sbr.rel (%p152) target = $region28
      $region27: #{tpu_custom_call.1} parent=5 // pred_region
        %s156 = ssub.s32 %s17, 1
        %s157 = sand.u32 %s30, 1
        %s158 = scalar_lea.sflag [#allocation3], %s157
        %s159 = sand.u32 %s30, 1
        %s160 = smul.addr %s159, 8
        %s161 = scalar_lea.vmem [#allocation2], %s160
        // Predicated region
        $region29: #{tpu_custom_call.1} parent=27 // pred_check
          %p162 = pneg %p43
        $region30: #{tpu_custom_call.1} parent=27 // pred_check_branch
          %164 = sbr.rel (%p162) target = $region32
        $region31: #{tpu_custom_call.1} parent=27 // pred_region
          %165 = dma.done %s158, 128
        $region32: #{tpu_custom_call.1} parent=27 // pred_fallthru
          _
        %s166 = sand.u32 %s56, 1
        %s167 = scalar_lea.sflag [#allocation6], %s166
        %s168 = sand.u32 %s56, 1
        %s169 = smul.addr %s168, 8
        %s170 = scalar_lea.vmem [#allocation5], %s169
        // Predicated region
        $region33: #{tpu_custom_call.1} parent=27 // pred_check
          %p171 = pneg %p69
        $region34: #{tpu_custom_call.1} parent=27 // pred_check_branch
          %173 = sbr.rel (%p171) target = $region36
        $region35: #{tpu_custom_call.1} parent=27 // pred_region
          %174 = dma.done %s167, 128
        $region36: #{tpu_custom_call.1} parent=27 // pred_fallthru
          _
        %s175 = sand.u32 %s30, 1
        %s176 = scalar_lea.sflag [#allocation3], %s175
        %s177 = sand.u32 %s30, 1
        %s178 = smul.addr %s177, 8
        %s179 = scalar_lea.vmem [#allocation2], %s178
        %p180 = pneg %p43
        %p181 = pneg %p40
        %s182 = sand.u32 %s56, 1
        %s183 = scalar_lea.sflag [#allocation6], %s182
        %s184 = sand.u32 %s56, 1
        %s185 = smul.addr %s184, 8
        %s186 = scalar_lea.vmem [#allocation5], %s185
        %p187 = pneg %p69
        %p188 = pneg %p66
        %p189 = pneg %p95
        %p190 = pneg %p92
        %s191 = sand.u32 %s82, 1
        %s192 = scalar_lea.sflag [#allocation4], %s191
        %s193 = sand.u32 %s82, 1
        %s194 = smul.addr %s193, 8
        %s195 = scalar_lea.vmem [#allocation7], %s194
        %v196 = vld [vmem:[%s161] sm:$0xff]
        %v197 = vld [vmem:[%s170] sm:$0xff]
        %v198 = vmul.f32 %v196, 0.5
        %v199 = vtanh.pop %v198
        %v200 = vmul.f32 %v199, 0.5
        %v201 = vadd.f32 %v200, 0.5
        %v202 = vmul.f32 %v201, %v197
        %v203 = vrot.slane %v202, 4
        %v204 = vadd.f32 %v202, %v203
        %v205 = vrot.slane %v204, 2
        %v206 = vadd.f32 %v204, %v205
        %v207 = vrot.slane %v206, 1
        %v208 = vadd.f32 %v206, %v207
        %v209 = vrot.slane %v201, 4
        %v210 = vadd.f32 %v201, %v209
        %v211 = vrot.slane %v210, 2
        %v212 = vadd.f32 %v210, %v211
        %v213 = vrot.slane %v212, 1
        %v214 = vadd.f32 %v212, %v213
        %v215 = vrot.slane %v197, 4
        %v216 = vadd.f32 %v197, %v215
        %v217 = vrot.slane %v216, 2
        %v218 = vadd.f32 %v216, %v217
        %v219 = vrot.slane %v218, 1
        %v220 = vadd.f32 %v218, %v219
        %v221 = vadd.f32 %v214, %v220
        %222 = vst [vmem:[%s195] sm:$0x1] %v208
        %223 = vst [vmem:[%s195 + $0x1] sm:$0x1] %v221
        %s224 = sand.u32 %s82, 1
        %s225 = scalar_lea.sflag [#allocation4], %s224
        %s226 = sand.u32 %s82, 1
        %s227 = smul.addr %s226, 8
        %s228 = scalar_lea.vmem [#allocation7], %s227
        // Predicated region
        $region37: #{tpu_custom_call.1} parent=27 // pred_check
          %p229 = pneg %p92
        $region38: #{tpu_custom_call.1} parent=27 // pred_check_branch
          %231 = sbr.rel (%p229) target = $region40
        $region39: #{tpu_custom_call.1} parent=27 // pred_region
          %s233 = ssub.s32 128, 128
          %234 = vsyncadd %s225, %s233
          %s235 = smul.addr %s22, 128
          %s236 = scalar_lea.hbm %s2, %s235
          %s238 = sshll.u32 %s228, 4
          %s239 = int_to_ptr.vmem [resolvable:$true] %s238
          %241 = dma.vmem_to_hbm [thread:$0]  %s239, 128, %s236, %s225
        $region40: #{tpu_custom_call.1} parent=27 // pred_fallthru
          _
      $region28: #{tpu_custom_call.1} parent=5 // pred_fallthru
        _
      %p242 = scmp.le.s32.totalorder 2, %s17
      // Predicated region
      $region41: #{tpu_custom_call.1} parent=5 // pred_check
        %p243 = pneg %p242
      $region42: #{tpu_custom_call.1} parent=5 // pred_check_branch
        %245 = sbr.rel (%p243) target = $region44
      $region43: #{tpu_custom_call.1} parent=5 // pred_region
        %s246 = ssub.s32 %s17, 2
        // Predicated region
        $region45: #{tpu_custom_call.1} parent=43 // pred_check
          %p247 = pneg %p98
        $region46: #{tpu_custom_call.1} parent=43 // pred_check_branch
          %249 = sbr.rel (%p247) target = $region48
        $region47: #{tpu_custom_call.1} parent=43 // pred_region
          %s250 = sand.u32 %s83, 1
          %s251 = scalar_lea.sflag [#allocation4], %s250
          %s252 = sand.u32 %s83, 1
          %s253 = smul.addr %s252, 8
          %s254 = scalar_lea.vmem [#allocation7], %s253
          %255 = dma.done %s251, 128
        $region48: #{tpu_custom_call.1} parent=43 // pred_fallthru
          _
      $region44: #{tpu_custom_call.1} parent=5 // pred_fallthru
        _
    $region6: #{tpu_custom_call.1} parent=1 // loop_footer
      %s21 = sadd.s32 1, %s17
    $region7: #{tpu_custom_call.1} parent=1 // loop_footer_branch
      %16 = sbr.rel target = $region3
    $region8: #{tpu_custom_call.1} parent=1 // loop_exit
      _
    %256 = vsyncpa [#allocation3], 1
    %s257 = scalar_lea.sflag [#allocation3], 1
    %258 = vsyncpa %s257, 1
    %259 = vsyncpa [#allocation6], 1
    %s260 = scalar_lea.sflag [#allocation6], 1
    %261 = vsyncpa %s260, 1
    %262 = vsyncpa [#allocation4], 1
    %s263 = scalar_lea.sflag [#allocation4], 1
    %264 = vsyncpa %s263, 1

</llo_original>
